<compile_context>
chip_gen: v5e
topology: v5e:2x2
jax: 0.10.0
libtpu: 0.0.40
codegen_flags: <defaults>
</compile_context>

<pallas_src>
import functools
import math

import jax
import jax.numpy as jnp
from jax.experimental import pallas as pl
from jax.experimental.pallas import tpu as pltpu

_MIB = 1024 * 1024


def _round_up(x, m):
    return ((x + m - 1) // m) * m


def _cdiv(a, b):
    return -(-a // b)


# ------------------------------ hardware budget ------------------------------ #
def _vmem_limit_bytes():
    """Generation-aware scoped-VMEM limit (v5e/v6e: 128 MiB phys, v7x: 64 MiB/TC)."""
    try:
        cap = pltpu.get_tpu_info().vmem_capacity_bytes
    except Exception:
        cap = 64 * _MIB
    if cap >= 128 * _MIB:
        return 96 * _MIB          # v5e / v6e
    return 44 * _MIB              # v7x (64 MiB per TensorCore) or unknown


# ------------------------------- Pallas kernels ------------------------------ #
def _gemm_bias_relu_kernel(x_ref, w_ref, b_ref, o_ref):
    """Path A: whole contraction per step; weight/bias fully VMEM-resident."""
    y = jnp.dot(x_ref[...], w_ref[...], preferred_element_type=jnp.float32)
    o_ref[...] = jnp.maximum(y + b_ref[...], 0.0).astype(o_ref.dtype)


def _gemm_bias_relu_ksplit_kernel(x_ref, w_ref, b_ref, o_ref, acc_ref):
    """Path B: K-tiled reduction with f32 accumulator (huge-weight fallback)."""
    k = pl.program_id(2)

    @pl.when(k == 0)
    def _():
        acc_ref[...] = jnp.zeros_like(acc_ref)

    acc_ref[...] += jnp.dot(x_ref[...], w_ref[...],
                            preferred_element_type=jnp.float32)

    @pl.when(k == pl.num_programs(2) - 1)
    def _():
        o_ref[...] = jnp.maximum(acc_ref[...] + b_ref[...],
                                 0.0).astype(o_ref.dtype)


# -------------------------------- tile planning ------------------------------ #
def _choose_tm(M, row_bytes, fixed_bytes, budget, min_grid=4):
    """Largest M tile that fits the budget and still gives >= min_grid (megacore)."""
    if M <= 8:
        return M if fixed_bytes + M * row_bytes <= budget else None
    cands = [c for c in (2048, 1024, 512, 256, 128, 64, 32, 16, 8)
             if c <= M and fixed_bytes + c * row_bytes <= budget]
    if not cands:
        return None
    for want in (min_grid, 2):
        for tm in cands:                     # descending -> largest with >= want steps
            if _cdiv(M, tm) >= want:
                return tm
    return cands[0]                          # everything fits in one tile


def _plan(M, K, OC, budget):
    oc_pad = _round_up(OC, 128)              # lane-dense weight columns / output

    # K padding: multiple of 128 when the zero-pad overhead is modest (lane-dense
    # x tiles), else multiple of 16 (bf16 sublane packing of the weight) so that
    # small-C layers don't blow up patch-matrix HBM traffic.
    k128 = _round_up(K, 128)
    k_pad = k128 if k128 <= K + max(K // 4, 32) else _round_up(K, 16)

    # ---- Path A: weight fully VMEM-resident, 1-D grid over patch rows. ----
    w_bytes = 2 * k_pad * oc_pad * 2 + 2 * oc_pad * 4     # bf16 W + f32 bias (x2 buf)
    row_bytes = 2 * k_pad * 2 + 2 * oc_pad * 4            # bf16 x + f32 out per row (x2 buf)
    tm = _choose_tm(M, row_bytes, w_bytes, budget)
    if tm is not None:
        return {"path": "A", "tm": tm, "k_pad": k_pad, "oc_pad": oc_pad}

    # ---- Path B: K-split reduction grid (weights too big for VMEM budget). ----
    tk = 512
    k_pad = _round_up(K, tk)
    tn = 256 if oc_pad % 256 == 0 else 128

    def est(tm_):
        return (2 * tm_ * tk * 2       # x tile, bf16, double-buffered
                + 2 * tk * tn * 2      # w tile, bf16, double-buffered
                + 2 * tn * 4           # bias
                + 2 * tm_ * tn * 4     # out tile, f32, double-buffered
                + tm_ * tn * 4)        # f32 accumulator scratch

    tm = 128
    for cand in (1024, 512, 256, 128):
        if cand <= M and est(cand) <= budget and _cdiv(M, cand) >= 2:
            tm = cand
            break
    if M < 128:
        tm = M
    return {"path": "B", "tm": tm, "tk": tk, "tn": tn,
            "k_pad": k_pad, "oc_pad": oc_pad}


# --------------------------------- GEMM wrapper ------------------------------ #
def _gemm_bias_relu(x_mat, w_p, b_p, plan, vmem_limit):
    """relu(x_mat @ W + b); x_mat:(M,k_pad) bf16 patches, W:(k_pad,oc_pad) bf16."""
    M, k_pad = x_mat.shape
    oc_pad = w_p.shape[1]

    if plan["path"] == "A":
        tm = plan["tm"]
        return pl.pallas_call(
            _gemm_bias_relu_kernel,
            out_shape=jax.ShapeDtypeStruct((M, oc_pad), jnp.float32),
            grid_spec=pltpu.PrefetchScalarGridSpec(
                num_scalar_prefetch=0,
                grid=(_cdiv(M, tm),),
                in_specs=[
                    pl.BlockSpec((tm, k_pad), lambda i: (i, 0)),       # patch rows
                    pl.BlockSpec((k_pad, oc_pad), lambda i: (0, 0)),   # resident weight
                    pl.BlockSpec((1, oc_pad), lambda i: (0, 0)),       # resident bias
                ],
                out_specs=pl.BlockSpec((tm, oc_pad), lambda i: (i, 0)),
            ),
            compiler_params=pltpu.CompilerParams(
                dimension_semantics=("parallel",),
                vmem_limit_bytes=vmem_limit,
            ),
        )(x_mat, w_p, b_p)

    tm, tk, tn = plan["tm"], plan["tk"], plan["tn"]
    grid = (_cdiv(M, tm), oc_pad // tn, plan["k_pad"] // tk)
    return pl.pallas_call(
        _gemm_bias_relu_ksplit_kernel,
        out_shape=jax.ShapeDtypeStruct((M, oc_pad), jnp.float32),
        grid_spec=pltpu.PrefetchScalarGridSpec(
            num_scalar_prefetch=0,
            grid=grid,
            in_specs=[
                pl.BlockSpec((tm, tk), lambda i, j, k: (i, k)),   # patch rows tile
                pl.BlockSpec((tk, tn), lambda i, j, k: (k, j)),   # weight tile
                pl.BlockSpec((1, tn), lambda i, j, k: (0, j)),    # bias tile
            ],
            out_specs=pl.BlockSpec((tm, tn), lambda i, j, k: (i, j)),
            scratch_shapes=[pltpu.VMEM((tm, tn), jnp.float32)],
        ),
        compiler_params=pltpu.CompilerParams(
            dimension_semantics=("parallel", "parallel", "arbitrary"),
            vmem_limit_bytes=vmem_limit,
        ),
    )(x_mat, w_p, b_p)


# ---------------------------------- JAX glue --------------------------------- #
def _im2col_bf16(x_nhwc_bf16, kh, kw, stride, padding, k_pad):
    """One bf16 materialization of the patch matrix (N*OH*OW, k_pad); the K
    zero-padding is folded into the concat.  Column order (KH, KW, C)."""
    N, H, W, C = x_nhwc_bf16.shape
    xp = jnp.pad(x_nhwc_bf16,
                 ((0, 0), (padding, padding), (padding, padding), (0, 0)))
    OH = (H + 2 * padding - kh) // stride + 1
    OW = (W + 2 * padding - kw) // stride + 1
    cols = []
    for i in range(kh):
        for j in range(kw):
            cols.append(xp[:, i:i + stride * OH:stride,
                           j:j + stride * OW:stride, :])
    kcc = kh * kw * C
    if k_pad > kcc:
        cols.append(jnp.zeros((N, OH, OW, k_pad - kcc), jnp.bfloat16))
    patches = jnp.concatenate(cols, axis=-1)               # (N, OH, OW, k_pad)
    return patches.reshape(N * OH * OW, k_pad), OH, OW


class Conv2dPallas:
    """Pallas equivalent of the PyTorch Conv2d module (conv + Identity + ReLU)."""

    def __init__(self, in_channels, out_channels, kernel_size, stride, padding,
                 activation="relu", normalization=None, *, key):
        assert activation == "relu"
        # TODO(synk): normalization='batch' (nn.BatchNorm2d) not implemented here;
        # only the default Identity path of the PyTorch module is supported.
        assert normalization is None
        self.in_channels = in_channels
        self.out_channels = out_channels
        self.kernel_size = kernel_size
        self.stride = stride
        self.padding = padding
        self.vmem_limit = _vmem_limit_bytes()
        self.vmem_budget = (self.vmem_limit * 3) // 4   # headroom for compiler scratch

        # Deterministic init matching PyTorch Conv2d default bounds.
        fan_in = in_channels * kernel_size * kernel_size
        bound = 1.0 / math.sqrt(fan_in)
        kw_, kb_ = jax.random.split(key)
        self.weight = jax.random.uniform(
            kw_, (out_channels, in_channels, kernel_size, kernel_size),
            dtype=jnp.float32, minval=-bound, maxval=bound)
        self.bias = jax.random.uniform(
            kb_, (out_channels,), dtype=jnp.float32, minval=-bound, maxval=bound)

    @functools.partial(jax.jit, static_argnums=0)
    def __call__(self, x):
        # x: (N, C, H, W) float32 -> (N, OC, OH, OW) float32
        N, C, H, W = x.shape
        kh = kw = self.kernel_size
        OC = self.out_channels
        OH = (H + 2 * self.padding - kh) // self.stride + 1
        OW = (W + 2 * self.padding - kw) // self.stride + 1
        M, K = N * OH * OW, kh * kw * C

        plan = _plan(M, K, OC, self.vmem_budget)
        k_pad, oc_pad = plan["k_pad"], plan["oc_pad"]

        # bf16 BEFORE im2col; the big patch matrix is built exactly once in bf16.
        x_nhwc = x.transpose(0, 2, 3, 1).astype(jnp.bfloat16)
        x_mat, _, _ = _im2col_bf16(x_nhwc, kh, kw, self.stride, self.padding, k_pad)

        # Weight (OC, C, KH, KW) -> rows ordered (KH, KW, C) to match patch columns.
        w_mat = self.weight.transpose(2, 3, 1, 0).reshape(K, OC)
        w_p = jnp.pad(w_mat, ((0, k_pad - K), (0, oc_pad - OC))).astype(jnp.bfloat16)
        b_p = jnp.pad(self.bias, (0, oc_pad - OC)).astype(jnp.float32).reshape(1, oc_pad)

        out_mat = _gemm_bias_relu(x_mat, w_p, b_p, plan, self.vmem_limit)  # (M, oc_pad) f32
        out = out_mat[:, :OC].reshape(N, OH, OW, OC)
        # TODO(synk): returning NHWC (and/or bf16) output would drop an extra HBM
        # pass; NCHW f32 kept to match the PyTorch module interface.
        return out.transpose(0, 3, 1, 2)


# ---------------------------------- Reference -------------------------------- #
def _reference(x, weight, bias, stride, padding):
    y = jax.lax.conv_general_dilated(
        x, weight,
        window_strides=(stride, stride),
        padding=[(padding, padding), (padding, padding)],
        dimension_numbers=("NCHW", "OIHW", "NCHW"))
    y = y + bias.reshape(1, -1, 1, 1)
    return jnp.maximum(y, 0.0)


if __name__ == "__main__":
    key = jax.random.PRNGKey(0)
    k_x, k_p = jax.random.split(key)

    N, C, H, W = 2, 4, 16, 16
    OC, K, S, P = 8, 3, 1, 1

    x = jax.random.normal(k_x, (N, C, H, W), dtype=jnp.float32)

    module = Conv2dPallas(C, OC, K, S, P, activation="relu",
                          normalization=None, key=k_p)

    out = jax.block_until_ready(module(x))

    ref = _reference(x, module.weight, module.bias, S, P)
    assert out.shape == ref.shape == (N, OC, H, W), (out.shape, ref.shape)
    # bf16 MXU operands with f32 accumulation -> loosened tolerance vs. f32 ref.
    assert jnp.allclose(out, ref, rtol=3e-2, atol=3e-2), \
        float(jnp.max(jnp.abs(out - ref)))

    print("KERNEL_OK")
</pallas_src>

<mosaic_0001>
module attributes {stable_mosaic.version = 11 : i64} {
  func.func @_gemm_bias_relu_kernel(%arg0: i32, %arg1: memref<128x48xbf16, #tpu.memory_space<vmem>>, %arg2: memref<48x128xbf16, #tpu.memory_space<vmem>>, %arg3: memref<1x128xf32, #tpu.memory_space<vmem>>, %arg4: memref<128x128xf32, #tpu.memory_space<vmem>>) attributes {dimension_semantics = [#tpu.dimension_semantics<parallel>], iteration_bounds = array<i64: 4>, scalar_prefetch = 0 : i64, scratch_operands = 0 : i64, tpu.core_type = #tpu.core_type<tc>, window_params = [{transform_indices = @transform_0, window_bounds = array<i64: 128, 48>}, {pipeline_mode = #tpu.pipeline_mode<synchronous>, transform_indices = @transform_1, window_bounds = array<i64: 48, 128>}, {pipeline_mode = #tpu.pipeline_mode<synchronous>, transform_indices = @transform_2, window_bounds = array<i64: 1, 128>}, {transform_indices = @transform_3, window_bounds = array<i64: 128, 128>}]} {
    %c0 = arith.constant 0 : index
    %c0_0 = arith.constant 0 : index
    %0 = vector.load %arg1[%c0, %c0_0] : memref<128x48xbf16, #tpu.memory_space<vmem>>, vector<128x48xbf16>
    %c0_1 = arith.constant 0 : index
    %c0_2 = arith.constant 0 : index
    %1 = vector.load %arg2[%c0_1, %c0_2] : memref<48x128xbf16, #tpu.memory_space<vmem>>, vector<48x128xbf16>
    %cst = arith.constant dense<0.000000e+00> : vector<128x128xf32>
    %2 = tpu.matmul %0, %1, %cst {dimension_numbers = #tpu.dot_dimension_numbers<[1], [0], [0], [1], [0, 0, 1, 1], [], []>} : vector<128x48xbf16>, vector<48x128xbf16>, vector<128x128xf32> -> vector<128x128xf32>
    %c0_3 = arith.constant 0 : index
    %c0_4 = arith.constant 0 : index
    %3 = vector.load %arg3[%c0_3, %c0_4] : memref<1x128xf32, #tpu.memory_space<vmem>>, vector<1x128xf32>
    %4 = vector.broadcast %3 : vector<1x128xf32> to vector<128x128xf32>
    %5 = arith.addf %2, %4 : vector<128x128xf32>
    %cst_5 = arith.constant 0.000000e+00 : f32
    %6 = vector.broadcast %cst_5 : f32 to vector<128x128xf32>
    %7 = arith.maximumf %5, %6 : vector<128x128xf32>
    %c0_6 = arith.constant 0 : index
    %c0_7 = arith.constant 0 : index
    %8 = vector.load %arg4[%c0_6, %c0_7] : memref<128x128xf32, #tpu.memory_space<vmem>>, vector<128x128xf32>
    tpu.vector_store %arg4[%c0_6, %c0_7], %7 {strides = array<i32>} : memref<128x128xf32, #tpu.memory_space<vmem>>, vector<128x128xf32>,
    return
  }
  func.func @transform_0(%arg0: i32) -> (i32, i32) {
    %c0_i32 = arith.constant 0 : i32
    %c0_i32_0 = arith.constant 0 : i32
    return %arg0, %c0_i32 : i32, i32
  }
  func.func @transform_1(%arg0: i32) -> (i32, i32) {
    %c0_i32 = arith.constant 0 : i32
    %c0_i32_0 = arith.constant 0 : i32
    %c0_i32_1 = arith.constant 0 : i32
    return %c0_i32, %c0_i32_0 : i32, i32
  }
  func.func @transform_2(%arg0: i32) -> (i32, i32) {
    %c0_i32 = arith.constant 0 : i32
    %c0_i32_0 = arith.constant 0 : i32
    %c0_i32_1 = arith.constant 0 : i32
    return %c0_i32, %c0_i32_0 : i32, i32
  }
  func.func @transform_3(%arg0: i32) -> (i32, i32) {
    %c0_i32 = arith.constant 0 : i32
    %c0_i32_0 = arith.constant 0 : i32
    return %arg0, %c0_i32 : i32, i32
  }
}

</mosaic_0001>

<llo_original>
// kernel: a_call__.1
$region0: #{a_call__.1}
  #allocation0 [shape = 'u32[]', space=smem, size = 0x4, offset = 0x4, fixed_abs, tag = 'smem constant byte address 0x4 - core index']
  #allocation1 [shape = 'u32[72,128]{1,0:T(1,128)}', space=vmem, size = 0x9000, scoped, tag = 'internal scratch']
  %s0 = inlined_call_operand.vmem [shape: bf16[512,48], index: 0, kind: input, shape index: {}]
  %s1 = inlined_call_operand.vmem [shape: bf16[48,128], index: 1, kind: input, shape index: {}]
  %s2 = inlined_call_operand.vmem [shape: f32[1,128], index: 2, kind: input, shape index: {}]
  %s3 = inlined_call_operand.vmem [shape: f32[512,128], index: 3, kind: output, shape index: {}]
  %s4 = sld [smem:[#allocation0]]
  $region45: #{a_call__.1} parent=0
    _
  %s6 = ssub.s32 1, %s4
  %s7 = scalar_select 0, %s6, %s4
  loop: start=0, step=1, limit=6
  $region2: #{a_call__.1} parent=0 // loop_pre_header
    _
  $region3: #{a_call__.1} parent=0 // loop_header
    %s9 = sphi 0, %s13
    %p10 = scmp.ge.s32.totalorder %s9, 6
    %s19 = sphi 0, %s21
    %s22 = sphi 0, %s19
    %s23 = sphi 0, %s22
    %s39 = sphi 0, %s23
    %s43 = sphi 0, %s43
    %s45 = sphi 0, %s43
    %s46 = sphi 0, %s45
    %s60 = sphi 0, %s46
    %s64 = sphi 0, %s64
    %s66 = sphi 0, %s64
    %s67 = sphi 0, %s66
    %s81 = sphi 0, %s67
    %s87 = sphi 0, %s89
    %s90 = sphi 0, %s87
    %s91 = sphi 0, %s90
    %s107 = sphi 0, %s91
  $region4: #{a_call__.1} parent=0 // loop_header_branch
    %12 = sbr.rel (%p10) target = $region8
  $region5: #{a_call__.1} parent=0 // loop_body
    %s14 = ssub.s32 %s9, 1
    %s15 = ssub.s32 %s9, 2
    %s16 = sadd.s32 %s9, 1
    %s17 = ssub.s32 %s9, %s16
    %p18 = scmp.eq.s32.totalorder %s17, 0
    %s20 = sadd.s32 %s19, 1
    %s21 = scalar_select %p18, %s19, %s20
    %p24 = pneg %p18
    %p25 = scmp.eq.s32.totalorder %s9, 3
    %p26 = por %p24, %p25
    %p27 = scmp.ne.s32.totalorder %s19, %s22
    %p28 = scmp.eq.s32.totalorder %s9, 0
    %p29 = por %p27, %p28
    %p30 = scmp.ne.s32.totalorder %s19, %s22
    %p31 = scmp.eq.s32.totalorder %s14, 3
    %p32 = por %p30, %p31
    %p33 = scmp.ne.s32.totalorder %s22, %s23
    %p34 = scmp.eq.s32.totalorder %s14, 0
    %p35 = por %p33, %p34
    %p36 = scmp.ne.s32.totalorder %s22, %s23
    %p37 = scmp.eq.s32.totalorder %s15, 3
    %p38 = por %p36, %p37
    %p40 = scmp.ne.s32.totalorder %s23, %s39
    %p41 = scmp.eq.s32.totalorder %s15, 0
    %p42 = por %p40, %p41
    %s44 = sadd.s32 %s43, 1
    %p47 = scmp.eq.s32.totalorder %s9, 3
    %p48 = scmp.ne.s32.totalorder %s43, %s45
    %p49 = scmp.eq.s32.totalorder %s9, 0
    %p50 = por %p48, %p49
    %p51 = scmp.ne.s32.totalorder %s43, %s45
    %p52 = scmp.eq.s32.totalorder %s14, 3
    %p53 = por %p51, %p52
    %p54 = scmp.ne.s32.totalorder %s45, %s46
    %p55 = scmp.eq.s32.totalorder %s14, 0
    %p56 = por %p54, %p55
    %p57 = scmp.ne.s32.totalorder %s45, %s46
    %p58 = scmp.eq.s32.totalorder %s15, 3
    %p59 = por %p57, %p58
    %p61 = scmp.ne.s32.totalorder %s46, %s60
    %p62 = scmp.eq.s32.totalorder %s15, 0
    %p63 = por %p61, %p62
    %s65 = sadd.s32 %s64, 1
    %p68 = scmp.eq.s32.totalorder %s9, 3
    %p69 = scmp.ne.s32.totalorder %s64, %s66
    %p70 = scmp.eq.s32.totalorder %s9, 0
    %p71 = por %p69, %p70
    %p72 = scmp.ne.s32.totalorder %s64, %s66
    %p73 = scmp.eq.s32.totalorder %s14, 3
    %p74 = por %p72, %p73
    %p75 = scmp.ne.s32.totalorder %s66, %s67
    %p76 = scmp.eq.s32.totalorder %s14, 0
    %p77 = por %p75, %p76
    %p78 = scmp.ne.s32.totalorder %s66, %s67
    %p79 = scmp.eq.s32.totalorder %s15, 3
    %p80 = por %p78, %p79
    %p82 = scmp.ne.s32.totalorder %s67, %s81
    %p83 = scmp.eq.s32.totalorder %s15, 0
    %p84 = por %p82, %p83
    %s85 = ssub.s32 %s9, %s16
    %p86 = scmp.eq.s32.totalorder %s85, 0
    %s88 = sadd.s32 %s87, 1
    %s89 = scalar_select %p86, %s87, %s88
    %p92 = pneg %p86
    %p93 = scmp.eq.s32.totalorder %s9, 3
    %p94 = por %p92, %p93
    %p95 = scmp.ne.s32.totalorder %s87, %s90
    %p96 = scmp.eq.s32.totalorder %s9, 0
    %p97 = por %p95, %p96
    %p98 = scmp.ne.s32.totalorder %s87, %s90
    %p99 = scmp.eq.s32.totalorder %s14, 3
    %p100 = por %p98, %p99
    %p101 = scmp.ne.s32.totalorder %s90, %s91
    %p102 = scmp.eq.s32.totalorder %s14, 0
    %p103 = por %p101, %p102
    %p104 = scmp.ne.s32.totalorder %s90, %s91
    %p105 = scmp.eq.s32.totalorder %s15, 3
    %p106 = por %p104, %p105
    %p108 = scmp.ne.s32.totalorder %s91, %s107
    %p109 = scmp.eq.s32.totalorder %s15, 0
    %p110 = por %p108, %p109
    %p111 = scmp.le.s32.totalorder 1, %s9
    %p112 = scmp.lt.s32.totalorder %s9, 5
    %p113 = pnand %p111, %p112
    %p114 = pneg %p113
    // Predicated region
    $region9: #{a_call__.1} parent=5 // pred_check
      _
    $region10: #{a_call__.1} parent=5 // pred_check_branch
      %116 = sbr.rel (%p113) target = $region12
    $region11: #{a_call__.1} parent=5 // pred_region
      %s117 = ssub.s32 %s9, 1
      // Predicated region
      $region13: #{a_call__.1} parent=11 // pred_check
        %p118 = pneg %p56
      $region14: #{a_call__.1} parent=11 // pred_check_branch
        %120 = sbr.rel (%p118) target = $region16
      $region15: #{a_call__.1} parent=11 // pred_region
        _
      $region16: #{a_call__.1} parent=11 // pred_fallthru
        _
      // Predicated region
      $region17: #{a_call__.1} parent=11 // pred_check
        %p121 = pneg %p77
      $region18: #{a_call__.1} parent=11 // pred_check_branch
        %123 = sbr.rel (%p121) target = $region20
      $region19: #{a_call__.1} parent=11 // pred_region
        _
      $region20: #{a_call__.1} parent=11 // pred_fallthru
        _
    $region12: #{a_call__.1} parent=5 // pred_fallthru
      _
    %p124 = scmp.lt.s32.totalorder %s9, 4
    // Predicated region
    $region21: #{a_call__.1} parent=5 // pred_check
      %p125 = pneg %p124
    $region22: #{a_call__.1} parent=5 // pred_check_branch
      %127 = sbr.rel (%p125) target = $region24
    $region23: #{a_call__.1} parent=5 // pred_region
      // Predicated region
      $region25: #{a_call__.1} parent=23 // pred_check
        %p128 = pneg %p29
      $region26: #{a_call__.1} parent=23 // pred_check_branch
        %130 = sbr.rel (%p128) target = $region28
      $region27: #{a_call__.1} parent=23 // pred_region
        %s131 = smul.u32 16, %s9
        %p132 = scmp.lt.s32.totalorder %s131, 63
        %s133 = scalar_select %p132, %s131, 63
        %s134 = smul.addr %s133, 4
        %s135 = scalar_lea.vmem %s0, %s134
        %s136 = smul.u32 16, %s9
      $region28: #{a_call__.1} parent=23 // pred_fallthru
        _
    $region24: #{a_call__.1} parent=5 // pred_fallthru
      _
    %p137 = scmp.le.s32.totalorder 1, %s9
    %p138 = scmp.lt.s32.totalorder %s9, 5
    %p139 = pnand %p137, %p138
    %p140 = pneg %p139
    // Predicated region
    $region29: #{a_call__.1} parent=5 // pred_check
      _
    $region30: #{a_call__.1} parent=5 // pred_check_branch
      %142 = sbr.rel (%p139) target = $region32
    $region31: #{a_call__.1} parent=5 // pred_region
      %s143 = ssub.s32 %s9, 1
      %s144 = smul.u32 16, %s14
      %p145 = scmp.lt.s32.totalorder %s144, 63
      %s146 = scalar_select %p145, %s144, 63
      %s147 = smul.addr %s146, 4
      %s148 = scalar_lea.vmem %s0, %s147
      %p149 = pneg %p35
      %p150 = pneg %p32
      %p151 = pneg %p56
      %p152 = pneg %p53
      %p153 = pneg %p77
      %p154 = pneg %p74
      %p155 = pneg %p103
      %p156 = pneg %p100
      %s157 = smul.u32 16, %s14
      %p158 = scmp.lt.s32.totalorder %s157, 63
      %s159 = scalar_select %p158, %s157, 63
      %s160 = smul.addr %s159, 8
      %s161 = scalar_lea.vmem %s3, %s160
      %s162 = smul.u32 16, %s14
      %p163 = scmp.lt.s32.totalorder %s162, 63
      %s164 = scalar_select %p163, %s162, 63
      %s165 = smul.addr %s164, 4
      %s166 = scalar_lea.vmem %s0, %s165
      %s167 = smul.u32 16, %s14
      %s168 = smul.u32 16, %s14
      %p169 = scmp.lt.s32.totalorder %s168, 63
      %s170 = scalar_select %p169, %s168, 63
      %s171 = smul.addr %s170, 8
      %s172 = scalar_lea.vmem %s3, %s171
      %s173 = smul.u32 16, %s14
      %v175 = vld [vmem:[%s166] sm:$0xf]
      %v176 = vld [vmem:[%s166 + $0x4] sm:$0xf]
      %v177 = vld [vmem:[%s166 + $0x8] sm:$0xf]
      %v178 = vld [vmem:[%s166 + $0xc] sm:$0xf]
      %v179 = vld [vmem:[%s166 + $0x10] sm:$0xf]
      %v180 = vld [vmem:[%s166 + $0x14] sm:$0xf]
      %v181 = vld [vmem:[%s166 + $0x18] sm:$0xf]
      %v182 = vld [vmem:[%s166 + $0x1c] sm:$0xf]
      %v183 = vld [vmem:[%s166 + $0x20] sm:$0xf]
      %v184 = vld [vmem:[%s166 + $0x24] sm:$0xf]
      %v185 = vld [vmem:[%s166 + $0x28] sm:$0xf]
      %v186 = vld [vmem:[%s166 + $0x2c] sm:$0xf]
      %v187 = vld [vmem:[%s166 + $0x30] sm:$0xf]
      %v188 = vld [vmem:[%s166 + $0x34] sm:$0xf]
      %v189 = vld [vmem:[%s166 + $0x38] sm:$0xf]
      %v190 = vld [vmem:[%s166 + $0x3c] sm:$0xf]
      %v191 = vld [vmem:[%s1] sm:$0xf]
      %v192 = vld [vmem:[%s1 + $0x4] sm:$0xf]
      %v193 = vld [vmem:[%s1 + $0x8] sm:$0xf]
      %v194 = vld [vmem:[%s1 + $0xc] sm:$0xf]
      %v195 = vld [vmem:[%s1 + $0x10] sm:$0xf]
      %v196 = vld [vmem:[%s1 + $0x14] sm:$0xf]
      %v197 = vld [vmem:[%s2] sm:$0x1]
      %v199 = vperm.slane %v197, 0
      %v217 = vunpack.c.l.b16 %v175
      %v218 = vunpack.c.l.b16 %v176
      %v219 = vunpack.c.l.b16 %v177
      %v220 = vunpack.c.l.b16 %v178
      %v221 = vunpack.c.l.b16 %v179
      %v222 = vunpack.c.l.b16 %v180
      %v223 = vunpack.c.l.b16 %v181
      %v224 = vunpack.c.l.b16 %v182
      %v225 = vunpack.c.l.b16 %v183
      %v226 = vunpack.c.l.b16 %v184
      %v227 = vunpack.c.l.b16 %v185
      %v228 = vunpack.c.l.b16 %v186
      %v229 = vunpack.c.l.b16 %v187
      %v230 = vunpack.c.l.b16 %v188
      %v231 = vunpack.c.l.b16 %v189
      %v232 = vunpack.c.l.b16 %v190
      %v233 = vpack.c.b16 %v218, %v217
      %v234 = vpack.c.b16 %v220, %v219
      %v235 = vpack.c.b16 %v222, %v221
      %v236 = vpack.c.b16 %v224, %v223
      %v237 = vpack.c.b16 %v226, %v225
      %v238 = vpack.c.b16 %v228, %v227
      %v239 = vpack.c.b16 %v230, %v229
      %v240 = vpack.c.b16 %v232, %v231
      %v247 = vunpack.c.l.b16 %v191
      %v248 = vunpack.c.l.b16 %v192
      %v249 = vunpack.c.l.b16 %v193
      %v250 = vunpack.c.l.b16 %v194
      %v251 = vunpack.c.l.b16 %v195
      %v252 = vunpack.c.l.b16 %v196
      %v253 = vpack.c.b16 %v248, %v247
      %v254 = vpack.c.b16 %v250, %v249
      %v255 = vpack.c.b16 %v252, %v251
      %vm259 = vcmask 392192
      %v261 = vsel %vm259, %v233, 0
      %v264 = vsel %vm259, %v234, 0
      %v267 = vsel %vm259, %v235, 0
      %v270 = vsel %vm259, %v236, 0
      %v273 = vsel %vm259, %v237, 0
      %v276 = vsel %vm259, %v238, 0
      %v279 = vsel %vm259, %v239, 0
      %v282 = vsel %vm259, %v240, 0
      %284 = vmatpush.bf16.msra.mxu0 0
      %285 = vmatpush.bf16.msra.mxu0 0
      %286 = vmatpush.bf16.msra.mxu0 0
      %287 = vmatpush.bf16.msra.mxu0 0
      %288 = vmatpush.bf16.msra.mxu0 0
      %289 = vmatpush.bf16.msra.mxu0 %v255
      %290 = vmatpush.bf16.msra.mxu0 %v254
      %291 = vmatpush.bf16.msra.mxu0 %v253
      %292 = vmatmul.bf16.gmra.mxu0 %v261
      %v293 = vpop.f32.mrf.mxu0
      %v294 = vadd.f32 %v199, %v293
      %v295 = vpop.f32.mrf.mxu0
      %v296 = vadd.f32 %v199, %v295
      %297 = vmatmul.bf16.gmra.mxu0 %v264
      %v298 = vpop.f32.mrf.mxu0
      %v299 = vadd.f32 %v199, %v298
      %v300 = vpop.f32.mrf.mxu0
      %v301 = vadd.f32 %v199, %v300
      %302 = vmatmul.bf16.gmra.mxu0 %v267
      %v303 = vpop.f32.mrf.mxu0
      %v304 = vadd.f32 %v199, %v303
      %v305 = vpop.f32.mrf.mxu0
      %v306 = vadd.f32 %v199, %v305
      %307 = vmatmul.bf16.gmra.mxu0 %v270
      %v308 = vpop.f32.mrf.mxu0
      %v309 = vadd.f32 %v199, %v308
      %v310 = vpop.f32.mrf.mxu0
      %v311 = vadd.f32 %v199, %v310
      %312 = vmatmul.bf16.gmra.mxu0 %v273
      %v313 = vpop.f32.mrf.mxu0
      %v314 = vadd.f32 %v199, %v313
      %v315 = vpop.f32.mrf.mxu0
      %v316 = vadd.f32 %v199, %v315
      %317 = vmatmul.bf16.gmra.mxu0 %v276
      %v318 = vpop.f32.mrf.mxu0
      %v319 = vadd.f32 %v199, %v318
      %v320 = vpop.f32.mrf.mxu0
      %v321 = vadd.f32 %v199, %v320
      %322 = vmatmul.bf16.gmra.mxu0 %v279
      %v323 = vpop.f32.mrf.mxu0
      %v324 = vadd.f32 %v199, %v323
      %v325 = vpop.f32.mrf.mxu0
      %v326 = vadd.f32 %v199, %v325
      %327 = vmatmul.bf16.gmra.mxu0 %v282
      %v328 = vpop.f32.mrf.mxu0
      %v329 = vadd.f32 %v199, %v328
      %v330 = vpop.f32.mrf.mxu0
      %v331 = vadd.f32 %v199, %v330
      %332 = vdwg.mxu0
      %v333 = vmax.f32 %v294, 0.0
      %v334 = vmax.f32 %v296, 0.0
      %v335 = vmax.f32 %v299, 0.0
      %v336 = vmax.f32 %v301, 0.0
      %v337 = vmax.f32 %v304, 0.0
      %v338 = vmax.f32 %v306, 0.0
      %v339 = vmax.f32 %v309, 0.0
      %v340 = vmax.f32 %v311, 0.0
      %v341 = vmax.f32 %v314, 0.0
      %v342 = vmax.f32 %v316, 0.0
      %v343 = vmax.f32 %v319, 0.0
      %v344 = vmax.f32 %v321, 0.0
      %v345 = vmax.f32 %v324, 0.0
      %v346 = vmax.f32 %v326, 0.0
      %v347 = vmax.f32 %v329, 0.0
      %v348 = vmax.f32 %v331, 0.0
      %349 = vst [vmem:[%s172] sm:$0xff] %v333
      %350 = vst [vmem:[%s172 + $0x8] sm:$0xff] %v334
      %351 = vst [vmem:[%s172 + $0x10] sm:$0xff] %v335
      %352 = vst [vmem:[%s172 + $0x18] sm:$0xff] %v336
      %353 = vst [vmem:[%s172 + $0x20] sm:$0xff] %v337
      %354 = vst [vmem:[%s172 + $0x28] sm:$0xff] %v338
      %355 = vst [vmem:[%s172 + $0x30] sm:$0xff] %v339
      %356 = vst [vmem:[%s172 + $0x38] sm:$0xff] %v340
      %357 = vst [vmem:[%s172 + $0x40] sm:$0xff] %v341
      %358 = vst [vmem:[%s172 + $0x48] sm:$0xff] %v342
      %359 = vst [vmem:[%s172 + $0x50] sm:$0xff] %v343
      %360 = vst [vmem:[%s172 + $0x58] sm:$0xff] %v344
      %361 = vst [vmem:[%s172 + $0x60] sm:$0xff] %v345
      %362 = vst [vmem:[%s172 + $0x68] sm:$0xff] %v346
      %363 = vst [vmem:[%s172 + $0x70] sm:$0xff] %v347
      %364 = vst [vmem:[%s172 + $0x78] sm:$0xff] %v348
      %s365 = smul.u32 16, %s14
      %p366 = scmp.lt.s32.totalorder %s365, 63
      %s367 = scalar_select %p366, %s365, 63
      %s368 = smul.addr %s367, 8
      %s369 = scalar_lea.vmem %s3, %s368
      // Predicated region
      $region33: #{a_call__.1} parent=31 // pred_check
        %p370 = pneg %p100
      $region34: #{a_call__.1} parent=31 // pred_check_branch
        %372 = sbr.rel (%p370) target = $region36
      $region35: #{a_call__.1} parent=31 // pred_region
        %s373 = smul.u32 16, %s14
      $region36: #{a_call__.1} parent=31 // pred_fallthru
        _
    $region32: #{a_call__.1} parent=5 // pred_fallthru
      _
    %p374 = scmp.le.s32.totalorder 2, %s9
    // Predicated region
    $region37: #{a_call__.1} parent=5 // pred_check
      %p375 = pneg %p374
    $region38: #{a_call__.1} parent=5 // pred_check_branch
      %377 = sbr.rel (%p375) target = $region40
    $region39: #{a_call__.1} parent=5 // pred_region
      %s378 = ssub.s32 %s9, 2
      // Predicated region
      $region41: #{a_call__.1} parent=39 // pred_check
        %p379 = pneg %p106
      $region42: #{a_call__.1} parent=39 // pred_check_branch
        %381 = sbr.rel (%p379) target = $region44
      $region43: #{a_call__.1} parent=39 // pred_region
        %s382 = smul.u32 16, %s15
        %p383 = scmp.lt.s32.totalorder %s382, 63
        %s384 = scalar_select %p383, %s382, 63
        %s385 = smul.addr %s384, 8
        %s386 = scalar_lea.vmem %s3, %s385
      $region44: #{a_call__.1} parent=39 // pred_fallthru
        _
    $region40: #{a_call__.1} parent=5 // pred_fallthru
      _
  $region6: #{a_call__.1} parent=0 // loop_footer
    %s13 = sadd.s32 1, %s9
  $region7: #{a_call__.1} parent=0 // loop_footer_branch
    %8 = sbr.rel target = $region3
  $region8: #{a_call__.1} parent=0 // loop_exit
    _

</llo_original>
